<compile_context>
chip_gen: v6e
topology: v6e:2x2x1
jax: 0.10.0
libtpu: 0.0.40
codegen_flags: <defaults>
</compile_context>

<pallas_src>
import math

import jax
import jax.numpy as jnp
from jax.experimental import pallas as pl
from jax.experimental.pallas import tpu as pltpu


def _task_weight_kernel(ids_ref, emb_ref, out_ref):
    """Gather embedding scalars via a 2-way-interleaved select chain (VPU-only).

    ids_ref: (rows, 128) int32 in VMEM -- task indices, lane-dense slab
    emb_ref: (T,)        f32   in SMEM -- embedding table (embedding_dim == 1)
    out_ref: (rows, 128) f32   in VMEM -- gathered task weights
    """
    ids = ids_ref[...]                       # (rows, 128) int32
    num_tasks = emb_ref.shape[0]             # static, tiny (e.g. 5)

    # Two independent accumulators: each id matches at most one t, so the
    # final sum is exact.  Out-of-range / padded ids fall through to 0.0
    # (torch nn.Embedding would raise instead -- see correctness note).
    acc0 = jnp.zeros(ids.shape, dtype=jnp.float32)
    acc1 = jnp.zeros(ids.shape, dtype=jnp.float32)
    for t in range(0, num_tasks, 2):
        acc0 = jnp.where(ids == t, emb_ref[t], acc0)
        if t + 1 < num_tasks:
            acc1 = jnp.where(ids == t + 1, emb_ref[t + 1], acc1)
    out_ref[...] = acc0 + acc1


def task_weight_forward(task_ids, emb_weight, *, block_rows=512):
    """task_ids: (B,) int, emb_weight: (T, 1) f32 -> (B, 1, 1, 1) f32."""
    b = task_ids.shape[0]
    lanes, sublanes = 128, 8
    tile_elems = lanes * sublanes                       # 1024 elems per (8,128) tile
    padded = pl.cdiv(b, tile_elems) * tile_elems        # pad B to whole vreg tiles
    rows = padded // lanes                              # multiple of 8

    ids_pad = jnp.zeros((padded,), jnp.int32).at[:b].set(task_ids.astype(jnp.int32))
    ids_slab = ids_pad.reshape(rows, lanes)             # lane-dense (rows, 128)
    emb_flat = emb_weight.reshape(-1).astype(jnp.float32)  # (T,) for SMEM

    if rows <= block_rows:
        # Realistic case: one gridless call over the whole (tiny) slab.
        out_slab = pl.pallas_call(
            _task_weight_kernel,
            out_shape=jax.ShapeDtypeStruct((rows, lanes), jnp.float32),
            in_specs=[
                pl.BlockSpec(memory_space=pltpu.MemorySpace.VMEM),   # ids slab
                pl.BlockSpec(memory_space=pltpu.MemorySpace.SMEM),   # table (T,)
            ],
            out_specs=pl.BlockSpec(memory_space=pltpu.MemorySpace.VMEM),
        )(ids_slab, emb_flat)
    else:
        # Huge-B variant: shard lane-dense row-blocks across a parallel grid
        # (uses both TensorCores on v7x; plain pipelined loop on v5e/v6e).
        grid_n = pl.cdiv(rows, block_rows)
        rows_padded = grid_n * block_rows
        if rows_padded != rows:
            ids_slab = jnp.zeros((rows_padded, lanes), jnp.int32).at[:rows].set(ids_slab)
        out_slab = pl.pallas_call(
            _task_weight_kernel,
            out_shape=jax.ShapeDtypeStruct((rows_padded, lanes), jnp.float32),
            grid=(grid_n,),
            in_specs=[
                pl.BlockSpec((block_rows, lanes), lambda i: (i, 0)),
                pl.BlockSpec(memory_space=pltpu.MemorySpace.SMEM),
            ],
            out_specs=pl.BlockSpec((block_rows, lanes), lambda i: (i, 0)),
            compiler_params=pltpu.CompilerParams(
                dimension_semantics=("parallel",)),
        )(ids_slab, emb_flat)

    # Module semantics require (B, 1, 1, 1); if fusing into a consumer kernel,
    # keep the lane-dense (rows, 128) slab instead and broadcast there.
    return out_slab.reshape(-1)[:b].reshape(b, 1, 1, 1)


if __name__ == "__main__":
    # Synthetic module setup: a small task list and deterministic params.
    task_list = ["seg", "depth", "normal", "edge", "keypoint"]
    num_tasks = len(task_list)

    key = jax.random.PRNGKey(0)
    # kaiming_normal_ on a (T, 1) tensor: fan_in = 1, gain = sqrt(2) -> std = sqrt(2)
    emb_weight = (jax.random.normal(key, (num_tasks, 1), dtype=jnp.float32)
                  * math.sqrt(2.0))

    # Example forward: a batch of task names (host-side index lookup, like torch).
    tasks = ["depth", "seg", "edge", "depth", "normal", "keypoint", "seg", "edge"]
    task_ids = jnp.asarray([task_list.index(t) for t in tasks], dtype=jnp.int32)

    out = task_weight_forward(task_ids, emb_weight)
    out = jax.block_until_ready(out)

    # Reference check (plain JAX gather) to make sure the kernel is correct.
    ref = emb_weight[task_ids].reshape(len(tasks), 1, 1, 1)
    assert out.shape == (len(tasks), 1, 1, 1)
    assert jnp.allclose(out, ref, atol=1e-6), "kernel mismatch vs reference"

    print("KERNEL_OK")
</pallas_src>

<mosaic_0001>
module attributes {stable_mosaic.version = 11 : i64} {
  func.func @_task_weight_kernel(%arg0: memref<8x128xi32, #tpu.memory_space<vmem>>, %arg1: memref<5xf32, #tpu.memory_space<smem>>, %arg2: memref<8x128xf32, #tpu.memory_space<vmem>>) attributes {dimension_semantics = [], scalar_prefetch = 0 : i64, scratch_operands = 0 : i64, tpu.core_type = #tpu.core_type<tc>} {
    %c0 = arith.constant 0 : index
    %c0_0 = arith.constant 0 : index
    %0 = vector.load %arg0[%c0, %c0_0] : memref<8x128xi32, #tpu.memory_space<vmem>>, vector<8x128xi32>
    %cst = arith.constant 0.000000e+00 : f32
    %1 = vector.broadcast %cst : f32 to vector<8x128xf32>
    %cst_1 = arith.constant 0.000000e+00 : f32
    %2 = vector.broadcast %cst_1 : f32 to vector<8x128xf32>
    %c0_i32 = arith.constant 0 : i32
    %3 = vector.broadcast %c0_i32 : i32 to vector<8x128xi32>
    %4 = arith.cmpi eq, %0, %3 : vector<8x128xi32>
    %c0_2 = arith.constant 0 : index
    %5 = memref.load %arg1[%c0_2] : memref<5xf32, #tpu.memory_space<smem>>
    %6 = vector.broadcast %5 : f32 to vector<8x128xf32>
    %7 = arith.select %4, %6, %1 : vector<8x128xi1>, vector<8x128xf32>
    %c1_i32 = arith.constant 1 : i32
    %8 = vector.broadcast %c1_i32 : i32 to vector<8x128xi32>
    %9 = arith.cmpi eq, %0, %8 : vector<8x128xi32>
    %c1 = arith.constant 1 : index
    %10 = memref.load %arg1[%c1] : memref<5xf32, #tpu.memory_space<smem>>
    %11 = vector.broadcast %10 : f32 to vector<8x128xf32>
    %12 = arith.select %9, %11, %2 : vector<8x128xi1>, vector<8x128xf32>
    %c2_i32 = arith.constant 2 : i32
    %13 = vector.broadcast %c2_i32 : i32 to vector<8x128xi32>
    %14 = arith.cmpi eq, %0, %13 : vector<8x128xi32>
    %c2 = arith.constant 2 : index
    %15 = memref.load %arg1[%c2] : memref<5xf32, #tpu.memory_space<smem>>
    %16 = vector.broadcast %15 : f32 to vector<8x128xf32>
    %17 = arith.select %14, %16, %7 : vector<8x128xi1>, vector<8x128xf32>
    %c3_i32 = arith.constant 3 : i32
    %18 = vector.broadcast %c3_i32 : i32 to vector<8x128xi32>
    %19 = arith.cmpi eq, %0, %18 : vector<8x128xi32>
    %c3 = arith.constant 3 : index
    %20 = memref.load %arg1[%c3] : memref<5xf32, #tpu.memory_space<smem>>
    %21 = vector.broadcast %20 : f32 to vector<8x128xf32>
    %22 = arith.select %19, %21, %12 : vector<8x128xi1>, vector<8x128xf32>
    %c4_i32 = arith.constant 4 : i32
    %23 = vector.broadcast %c4_i32 : i32 to vector<8x128xi32>
    %24 = arith.cmpi eq, %0, %23 : vector<8x128xi32>
    %c4 = arith.constant 4 : index
    %25 = memref.load %arg1[%c4] : memref<5xf32, #tpu.memory_space<smem>>
    %26 = vector.broadcast %25 : f32 to vector<8x128xf32>
    %27 = arith.select %24, %26, %17 : vector<8x128xi1>, vector<8x128xf32>
    %28 = arith.addf %27, %22 : vector<8x128xf32>
    %c0_3 = arith.constant 0 : index
    %c0_4 = arith.constant 0 : index
    %29 = vector.load %arg2[%c0_3, %c0_4] : memref<8x128xf32, #tpu.memory_space<vmem>>, vector<8x128xf32>
    tpu.vector_store %arg2[%c0_3, %c0_4], %28 {strides = array<i32>} : memref<8x128xf32, #tpu.memory_space<vmem>>, vector<8x128xf32>,
    return
  }
}

</mosaic_0001>

<llo_original>
// kernel: tpu_custom_call.1
$region0: #{tpu_custom_call.1}
  #allocation0 [shape = 'u32[]', space=smem, size = 0x4, offset = 0x4, fixed_abs, tag = 'smem constant byte address 0x4 - core index']
  #allocation1 [shape = 'u32[144,128]{1,0:T(1,128)}', space=vmem, size = 0x12000, scoped, tag = 'internal scratch']
  %s0 = inlined_call_operand.hbm [shape: s32[8,128], index: 0, kind: input, shape index: {}]
  %s1 = inlined_call_operand.vmem [shape: f32[5], index: 1, kind: input, shape index: {}]
  %s2 = inlined_call_operand.hbm [shape: f32[8,128], index: 2, kind: output, shape index: {}]
  %s3 = sld [smem:[#allocation0]]
  $region26: #{tpu_custom_call.1} parent=0
    _
  %s5 = ssub.s32 1, %s3
  %s6 = scalar_select 0, %s5, %s3
  $region1: #{tpu_custom_call.1} parent=0
    #allocation2 [shape = 'u8[4096]{0}', space=vmem, size = 0x1000, scoped, tag = 'input window, operand 0, single buffered']
    #allocation3 [shape = 's32[1]{0}', space=sflag, size = 0x4, scoped, tag = 'scoped memory for tpu_custom_call.1']
    #allocation4 [shape = 's32[1]{0}', space=sflag, size = 0x4, scoped, tag = 'scoped memory for tpu_custom_call.1']
    #allocation5 [shape = 's32[1]{0}', space=sflag, size = 0x4, scoped, tag = 'scoped memory for tpu_custom_call.1']
    #allocation6 [shape = 'u8[512]{0}', space=smem, size = 0x200, scoped, tag = 'input window, operand 1, single buffered']
    #allocation7 [shape = 'u8[4096]{0}', space=vmem, size = 0x1000, scoped, tag = 'output window, operand 0, single buffered']
    %7 = vsyncpa [#allocation3], 0
    %8 = vsyncpa [#allocation5], 0
    %9 = vsyncpa [#allocation4], 0
    // Predicated region
    $region2: #{tpu_custom_call.1} parent=1 // pred_check
      _
    $region3: #{tpu_custom_call.1} parent=1 // pred_check_branch
      %11 = sbr.rel (0) target = $region5
    $region4: #{tpu_custom_call.1} parent=1 // pred_region
      %s13 = ssub.s32 128, 128
      %14 = vsyncadd [#allocation3], %s13
      %s16 = sshll.u32 [#allocation2], 4
      %s17 = int_to_ptr.vmem [resolvable:$true] %s16
      %19 = dma.hbm_to_vmem [thread:$0]  %s0, 128, %s17, [#allocation3]
    $region5: #{tpu_custom_call.1} parent=1 // pred_fallthru
      _
    // Predicated region
    $region6: #{tpu_custom_call.1} parent=1 // pred_check
      _
    $region7: #{tpu_custom_call.1} parent=1 // pred_check_branch
      %21 = sbr.rel (0) target = $region9
    $region8: #{tpu_custom_call.1} parent=1 // pred_region
      %s23 = ssub.s32 16, 16
      %24 = vsyncadd [#allocation5], %s23
      %s26 = sshll.u32 %s1, 4
      %s27 = int_to_ptr.vmem [resolvable:$true] %s26
      %29 = dma.vmem_to_smem %s27, 16, [#allocation6], [#allocation5]
    $region9: #{tpu_custom_call.1} parent=1 // pred_fallthru
      _
    // Predicated region
    $region10: #{tpu_custom_call.1} parent=1 // pred_check
      _
    $region11: #{tpu_custom_call.1} parent=1 // pred_check_branch
      %31 = sbr.rel (0) target = $region13
    $region12: #{tpu_custom_call.1} parent=1 // pred_region
      %32 = dma.done [#allocation3], 128
    $region13: #{tpu_custom_call.1} parent=1 // pred_fallthru
      _
    // Predicated region
    $region14: #{tpu_custom_call.1} parent=1 // pred_check
      _
    $region15: #{tpu_custom_call.1} parent=1 // pred_check_branch
      %34 = sbr.rel (0) target = $region17
    $region16: #{tpu_custom_call.1} parent=1 // pred_region
      %35 = dma.done [#allocation5], 16
    $region17: #{tpu_custom_call.1} parent=1 // pred_fallthru
      _
    %36 = sfence
    %v37 = vld [vmem:[#allocation2] sm:$0xff]
    %vm38 = vcmp.eq.s32.totalorder %v37, 0
    %s39 = sld [smem:[#allocation6]]
    %v40 = vstv %s39
    %v41 = vsel %vm38, %v40, 0.0
    %vm42 = vcmp.eq.s32.totalorder %v37, 1
    %s43 = sld [smem:[#allocation6 + $0x1]]
    %v44 = vstv %s43
    %v45 = vsel %vm42, %v44, 0.0
    %vm46 = vcmp.eq.s32.totalorder %v37, 2
    %s47 = sld [smem:[#allocation6 + $0x2]]
    %v48 = vstv %s47
    %v49 = vsel %vm46, %v48, %v41
    %vm50 = vcmp.eq.s32.totalorder %v37, 3
    %s51 = sld [smem:[#allocation6 + $0x3]]
    %v52 = vstv %s51
    %v53 = vsel %vm50, %v52, %v45
    %vm54 = vcmp.eq.s32.totalorder %v37, 4
    %s55 = sld [smem:[#allocation6 + $0x4]]
    %v56 = vstv %s55
    %v57 = vsel %vm54, %v56, %v49
    %v58 = vadd.f32 %v57, %v53
    %59 = vst [vmem:[#allocation7] sm:$0xff] %v58
    // Predicated region
    $region18: #{tpu_custom_call.1} parent=1 // pred_check
      _
    $region19: #{tpu_custom_call.1} parent=1 // pred_check_branch
      %61 = sbr.rel (0) target = $region21
    $region20: #{tpu_custom_call.1} parent=1 // pred_region
      %s63 = ssub.s32 128, 128
      %64 = vsyncadd [#allocation4], %s63
      %s66 = sshll.u32 [#allocation7], 4
      %s67 = int_to_ptr.vmem [resolvable:$true] %s66
      %69 = dma.vmem_to_hbm [thread:$0]  %s67, 128, %s2, [#allocation4]
    $region21: #{tpu_custom_call.1} parent=1 // pred_fallthru
      _
    // Predicated region
    $region22: #{tpu_custom_call.1} parent=1 // pred_check
      _
    $region23: #{tpu_custom_call.1} parent=1 // pred_check_branch
      %71 = sbr.rel (0) target = $region25
    $region24: #{tpu_custom_call.1} parent=1 // pred_region
      %72 = dma.done [#allocation4], 128
    $region25: #{tpu_custom_call.1} parent=1 // pred_fallthru
      _
    %73 = vsyncpa [#allocation3], 1
    %74 = vsyncpa [#allocation4], 1
    %75 = vsyncpa [#allocation5], 1

</llo_original>
